<compile_context>
chip_gen: v7x
topology: tpu7x:2x2x1
jax: 0.10.0
libtpu: 0.0.40
codegen_flags: <defaults>
</compile_context>

<pallas_src>
import jax
import jax.numpy as jnp
from jax.experimental import pallas as pl
from jax.experimental.pallas import tpu as pltpu

BN_EPS = 1e-5
LANES = 128  # lane-pad every feature dim to this


def _bn_train(h, gamma, beta):
    """BatchNorm1d training semantics: batch mean, biased variance, affine.

    Fused as h * scale + shift (2 VPU ops/elem in the epilogue).
    """
    mean = jnp.mean(h, axis=0, keepdims=True)
    d = h - mean
    var = jnp.mean(d * d, axis=0, keepdims=True)
    inv = jax.lax.rsqrt(var + BN_EPS)
    scale = inv * gamma            # [1, F]
    shift = beta - mean * scale    # [1, F]
    return h * scale + shift


def decoder_kernel(x_ref, w4_ref, w_ref, v_ref, o_ref):
    # x_ref : [B, L]          (latent input)
    # w4_ref: [L, 128]        (fc4 weight, columns 8..127 zero)
    # w_ref : [3, 128, 128]   (fc5/fc6/fc7 weights, zero-padded)
    # v_ref : [10, 128]       (b4,g4,be4, b5,g5,be5, b6,g6,be6, b7)
    # o_ref : [B, 128]        (columns 12..127 are zero)
    x = x_ref[...]
    v = v_ref[...]                      # one [10,128] load, sliced statically
    b4, g4, be4 = v[0:1], v[1:2], v[2:3]
    b5, g5, be5 = v[3:4], v[4:5], v[5:6]
    b6, g6, be6 = v[6:7], v[7:8], v[8:9]
    b7 = v[9:10]

    # fc4 -> relu -> bn4
    h = jnp.dot(x, w4_ref[...], preferred_element_type=jnp.float32) + b4
    h = jnp.maximum(h, 0.0)
    h = _bn_train(h, g4, be4)

    # fc5 -> relu -> bn5
    h = jnp.dot(h, w_ref[0], preferred_element_type=jnp.float32) + b5
    h = jnp.maximum(h, 0.0)
    h = _bn_train(h, g5, be5)

    # fc6 -> relu -> bn6
    h = jnp.dot(h, w_ref[1], preferred_element_type=jnp.float32) + b6
    h = jnp.maximum(h, 0.0)
    h = _bn_train(h, g6, be6)

    # fc7 -> relu   (padded columns stay exactly zero: zero W cols, zero bias)
    h = jnp.dot(h, w_ref[2], preferred_element_type=jnp.float32) + b7
    h = jnp.maximum(h, 0.0)

    o_ref[...] = h  # lane-dense unmasked [B, 128] store


def pack_params(params):
    """Pack the 14 parameter arrays into 3 lane-padded VMEM buffers."""
    (w4, b4, g4, be4, w5, b5, g5, be5, w6, b6, g6, be6, w7, b7) = params

    def pad_w_full(w):  # -> [128, 128]
        i, o = w.shape
        return jnp.pad(w, ((0, LANES - i), (0, LANES - o)))

    def pad_v(v):       # [1, f] -> [1, 128]
        return jnp.pad(v, ((0, 0), (0, LANES - v.shape[1])))

    w4p = jnp.pad(w4, ((0, 0), (0, LANES - w4.shape[1])))     # [L, 128]
    wstack = jnp.stack([pad_w_full(w5), pad_w_full(w6), pad_w_full(w7)])
    vecs = jnp.concatenate(
        [pad_v(b4), pad_v(g4), pad_v(be4),
         pad_v(b5), pad_v(g5), pad_v(be5),
         pad_v(b6), pad_v(g6), pad_v(be6),
         pad_v(b7)], axis=0)                                  # [10, 128]
    return w4p, wstack, vecs


def decoder_forward(x, packed):
    """x: [B, latent_size] f32, packed = pack_params(params) -> [B, 12] f32."""
    w4p, wstack, vecs = packed
    B = x.shape[0]
    vmem = pl.BlockSpec(memory_space=pltpu.MemorySpace.VMEM)
    out = pl.pallas_call(
        decoder_kernel,
        out_shape=jax.ShapeDtypeStruct((B, LANES), jnp.float32),
        in_specs=[vmem, vmem, vmem, vmem],
        out_specs=vmem,
        compiler_params=pltpu.CompilerParams(
            vmem_limit_bytes=32 * 1024 * 1024),
    )(x, w4p, wstack, vecs)
    return out[:, :12]


def init_params(key, latent_size):
    """Deterministic synthetic parameters matching the PyTorch module shapes."""
    dims = [(latent_size, 8), (8, 64), (64, 32), (32, 12)]
    bn_dims = [8, 64, 32]  # fc_bn4, fc_bn5, fc_bn6
    keys = jax.random.split(key, 2 * len(dims) + 2 * len(bn_dims))
    ki = 0

    def linear(in_f, out_f):
        nonlocal ki
        # stored as [in, out] (transpose of PyTorch's [out, in])
        w = (jax.random.normal(keys[ki], (in_f, out_f), jnp.float32)
             * (1.0 / jnp.sqrt(in_f)))
        ki += 1
        b = jax.random.normal(keys[ki], (1, out_f), jnp.float32) * 0.1
        ki += 1
        return w, b

    def bn(f):
        nonlocal ki
        gamma = 1.0 + 0.1 * jax.random.normal(keys[ki], (1, f), jnp.float32)
        ki += 1
        beta = 0.1 * jax.random.normal(keys[ki], (1, f), jnp.float32)
        ki += 1
        return gamma, beta

    w4, b4 = linear(*dims[0]); g4, be4 = bn(bn_dims[0])
    w5, b5 = linear(*dims[1]); g5, be5 = bn(bn_dims[1])
    w6, b6 = linear(*dims[2]); g6, be6 = bn(bn_dims[2])
    w7, b7 = linear(*dims[3])

    return (w4, b4, g4, be4,
            w5, b5, g5, be5,
            w6, b6, g6, be6,
            w7, b7)


def decoder_reference(x, params):
    """Pure-JAX reference (unpacked params) for correctness checking."""
    (w4, b4, g4, be4, w5, b5, g5, be5, w6, b6, g6, be6, w7, b7) = params
    h = jnp.maximum(x @ w4 + b4, 0.0)
    h = _bn_train(h, g4, be4)
    h = jnp.maximum(h @ w5 + b5, 0.0)
    h = _bn_train(h, g5, be5)
    h = jnp.maximum(h @ w6 + b6, 0.0)
    h = _bn_train(h, g6, be6)
    h = jnp.maximum(h @ w7 + b7, 0.0)
    return h


if __name__ == "__main__":
    latent_size = 16
    batch = 8

    key = jax.random.PRNGKey(0)
    k_x, k_p = jax.random.split(key)
    x = jax.random.normal(k_x, (batch, latent_size), jnp.float32)
    params = init_params(k_p, latent_size)
    packed = pack_params(params)

    out = decoder_forward(x, packed)
    out = jax.block_until_ready(out)

    ref = decoder_reference(x, params)
    assert out.shape == (batch, 12), out.shape
    assert jnp.allclose(out, ref, atol=1e-4, rtol=1e-4), (
        float(jnp.max(jnp.abs(out - ref))))

    print("KERNEL_OK")
</pallas_src>

<mosaic_0001>
module attributes {stable_mosaic.version = 11 : i64} {
  func.func @decoder_kernel(%arg0: memref<8x16xf32, #tpu.memory_space<vmem>>, %arg1: memref<16x128xf32, #tpu.memory_space<vmem>>, %arg2: memref<3x128x128xf32, #tpu.memory_space<vmem>>, %arg3: memref<10x128xf32, #tpu.memory_space<vmem>>, %arg4: memref<8x128xf32, #tpu.memory_space<vmem>>) attributes {dimension_semantics = [], scalar_prefetch = 0 : i64, scratch_operands = 0 : i64, tpu.core_type = #tpu.core_type<tc>} {
    %c0 = arith.constant 0 : index
    %c0_0 = arith.constant 0 : index
    %0 = vector.load %arg0[%c0, %c0_0] : memref<8x16xf32, #tpu.memory_space<vmem>>, vector<8x16xf32>
    %c0_1 = arith.constant 0 : index
    %c0_2 = arith.constant 0 : index
    %1 = vector.load %arg3[%c0_1, %c0_2] : memref<10x128xf32, #tpu.memory_space<vmem>>, vector<10x128xf32>
    %2 = vector.extract_strided_slice %1 {offsets = [0, 0], sizes = [1, 128], strides = [1, 1]} : vector<10x128xf32> to vector<1x128xf32>
    %3 = vector.extract_strided_slice %1 {offsets = [1, 0], sizes = [1, 128], strides = [1, 1]} : vector<10x128xf32> to vector<1x128xf32>
    %4 = vector.extract_strided_slice %1 {offsets = [2, 0], sizes = [1, 128], strides = [1, 1]} : vector<10x128xf32> to vector<1x128xf32>
    %5 = vector.extract_strided_slice %1 {offsets = [3, 0], sizes = [1, 128], strides = [1, 1]} : vector<10x128xf32> to vector<1x128xf32>
    %6 = vector.extract_strided_slice %1 {offsets = [4, 0], sizes = [1, 128], strides = [1, 1]} : vector<10x128xf32> to vector<1x128xf32>
    %7 = vector.extract_strided_slice %1 {offsets = [5, 0], sizes = [1, 128], strides = [1, 1]} : vector<10x128xf32> to vector<1x128xf32>
    %8 = vector.extract_strided_slice %1 {offsets = [6, 0], sizes = [1, 128], strides = [1, 1]} : vector<10x128xf32> to vector<1x128xf32>
    %9 = vector.extract_strided_slice %1 {offsets = [7, 0], sizes = [1, 128], strides = [1, 1]} : vector<10x128xf32> to vector<1x128xf32>
    %10 = vector.extract_strided_slice %1 {offsets = [8, 0], sizes = [1, 128], strides = [1, 1]} : vector<10x128xf32> to vector<1x128xf32>
    %11 = vector.extract_strided_slice %1 {offsets = [9, 0], sizes = [1, 128], strides = [1, 1]} : vector<10x128xf32> to vector<1x128xf32>
    %c0_3 = arith.constant 0 : index
    %c0_4 = arith.constant 0 : index
    %12 = vector.load %arg1[%c0_3, %c0_4] : memref<16x128xf32, #tpu.memory_space<vmem>>, vector<16x128xf32>
    %cst = arith.constant dense<0.000000e+00> : vector<8x128xf32>
    %13 = tpu.matmul %0, %12, %cst {dimension_numbers = #tpu.dot_dimension_numbers<[1], [0], [0], [1], [0, 0, 1, 1], [], []>} : vector<8x16xf32>, vector<16x128xf32>, vector<8x128xf32> -> vector<8x128xf32>
    %14 = vector.broadcast %2 : vector<1x128xf32> to vector<8x128xf32>
    %15 = arith.addf %13, %14 : vector<8x128xf32>
    %cst_5 = arith.constant 0.000000e+00 : f32
    %16 = vector.broadcast %cst_5 : f32 to vector<8x128xf32>
    %17 = arith.maximumf %15, %16 : vector<8x128xf32>
    %cst_6 = arith.constant dense<0.000000e+00> : vector<128xf32>
    %18 = vector.multi_reduction <add>, %17, %cst_6 [0] : vector<8x128xf32> to vector<128xf32>
    %19 = vector.shape_cast %18 : vector<128xf32> to vector<1x128xf32>
    %cst_7 = arith.constant 8.000000e+00 : f32
    %20 = vector.broadcast %cst_7 : f32 to vector<1x128xf32>
    %21 = arith.divf %19, %20 : vector<1x128xf32>
    %22 = vector.broadcast %21 : vector<1x128xf32> to vector<8x128xf32>
    %23 = arith.subf %17, %22 : vector<8x128xf32>
    %24 = arith.mulf %23, %23 : vector<8x128xf32>
    %cst_8 = arith.constant dense<0.000000e+00> : vector<128xf32>
    %25 = vector.multi_reduction <add>, %24, %cst_8 [0] : vector<8x128xf32> to vector<128xf32>
    %26 = vector.shape_cast %25 : vector<128xf32> to vector<1x128xf32>
    %cst_9 = arith.constant 8.000000e+00 : f32
    %27 = vector.broadcast %cst_9 : f32 to vector<1x128xf32>
    %28 = arith.divf %26, %27 : vector<1x128xf32>
    %cst_10 = arith.constant 9.99999974E-6 : f32
    %29 = vector.broadcast %cst_10 : f32 to vector<1x128xf32>
    %30 = arith.addf %28, %29 : vector<1x128xf32>
    %31 = math.rsqrt %30 : vector<1x128xf32>
    %32 = arith.mulf %31, %3 : vector<1x128xf32>
    %33 = arith.mulf %21, %32 : vector<1x128xf32>
    %34 = arith.subf %4, %33 : vector<1x128xf32>
    %35 = vector.broadcast %32 : vector<1x128xf32> to vector<8x128xf32>
    %36 = arith.mulf %17, %35 : vector<8x128xf32>
    %37 = vector.broadcast %34 : vector<1x128xf32> to vector<8x128xf32>
    %38 = arith.addf %36, %37 : vector<8x128xf32>
    %c0_11 = arith.constant 0 : index
    %c0_12 = arith.constant 0 : index
    %c0_13 = arith.constant 0 : index
    %39 = vector.load %arg2[%c0_11, %c0_12, %c0_13] : memref<3x128x128xf32, #tpu.memory_space<vmem>>, vector<1x128x128xf32>
    %40 = vector.shape_cast %39 : vector<1x128x128xf32> to vector<128x128xf32>
    %cst_14 = arith.constant dense<0.000000e+00> : vector<8x128xf32>
    %41 = tpu.matmul %38, %40, %cst_14 {dimension_numbers = #tpu.dot_dimension_numbers<[1], [0], [0], [1], [0, 0, 1, 1], [], []>} : vector<8x128xf32>, vector<128x128xf32>, vector<8x128xf32> -> vector<8x128xf32>
    %42 = vector.broadcast %5 : vector<1x128xf32> to vector<8x128xf32>
    %43 = arith.addf %41, %42 : vector<8x128xf32>
    %cst_15 = arith.constant 0.000000e+00 : f32
    %44 = vector.broadcast %cst_15 : f32 to vector<8x128xf32>
    %45 = arith.maximumf %43, %44 : vector<8x128xf32>
    %cst_16 = arith.constant dense<0.000000e+00> : vector<128xf32>
    %46 = vector.multi_reduction <add>, %45, %cst_16 [0] : vector<8x128xf32> to vector<128xf32>
    %47 = vector.shape_cast %46 : vector<128xf32> to vector<1x128xf32>
    %cst_17 = arith.constant 8.000000e+00 : f32
    %48 = vector.broadcast %cst_17 : f32 to vector<1x128xf32>
    %49 = arith.divf %47, %48 : vector<1x128xf32>
    %50 = vector.broadcast %49 : vector<1x128xf32> to vector<8x128xf32>
    %51 = arith.subf %45, %50 : vector<8x128xf32>
    %52 = arith.mulf %51, %51 : vector<8x128xf32>
    %cst_18 = arith.constant dense<0.000000e+00> : vector<128xf32>
    %53 = vector.multi_reduction <add>, %52, %cst_18 [0] : vector<8x128xf32> to vector<128xf32>
    %54 = vector.shape_cast %53 : vector<128xf32> to vector<1x128xf32>
    %cst_19 = arith.constant 8.000000e+00 : f32
    %55 = vector.broadcast %cst_19 : f32 to vector<1x128xf32>
    %56 = arith.divf %54, %55 : vector<1x128xf32>
    %cst_20 = arith.constant 9.99999974E-6 : f32
    %57 = vector.broadcast %cst_20 : f32 to vector<1x128xf32>
    %58 = arith.addf %56, %57 : vector<1x128xf32>
    %59 = math.rsqrt %58 : vector<1x128xf32>
    %60 = arith.mulf %59, %6 : vector<1x128xf32>
    %61 = arith.mulf %49, %60 : vector<1x128xf32>
    %62 = arith.subf %7, %61 : vector<1x128xf32>
    %63 = vector.broadcast %60 : vector<1x128xf32> to vector<8x128xf32>
    %64 = arith.mulf %45, %63 : vector<8x128xf32>
    %65 = vector.broadcast %62 : vector<1x128xf32> to vector<8x128xf32>
    %66 = arith.addf %64, %65 : vector<8x128xf32>
    %c1 = arith.constant 1 : index
    %c0_21 = arith.constant 0 : index
    %c0_22 = arith.constant 0 : index
    %67 = vector.load %arg2[%c1, %c0_21, %c0_22] : memref<3x128x128xf32, #tpu.memory_space<vmem>>, vector<1x128x128xf32>
    %68 = vector.shape_cast %67 : vector<1x128x128xf32> to vector<128x128xf32>
    %cst_23 = arith.constant dense<0.000000e+00> : vector<8x128xf32>
    %69 = tpu.matmul %66, %68, %cst_23 {dimension_numbers = #tpu.dot_dimension_numbers<[1], [0], [0], [1], [0, 0, 1, 1], [], []>} : vector<8x128xf32>, vector<128x128xf32>, vector<8x128xf32> -> vector<8x128xf32>
    %70 = vector.broadcast %8 : vector<1x128xf32> to vector<8x128xf32>
    %71 = arith.addf %69, %70 : vector<8x128xf32>
    %cst_24 = arith.constant 0.000000e+00 : f32
    %72 = vector.broadcast %cst_24 : f32 to vector<8x128xf32>
    %73 = arith.maximumf %71, %72 : vector<8x128xf32>
    %cst_25 = arith.constant dense<0.000000e+00> : vector<128xf32>
    %74 = vector.multi_reduction <add>, %73, %cst_25 [0] : vector<8x128xf32> to vector<128xf32>
    %75 = vector.shape_cast %74 : vector<128xf32> to vector<1x128xf32>
    %cst_26 = arith.constant 8.000000e+00 : f32
    %76 = vector.broadcast %cst_26 : f32 to vector<1x128xf32>
    %77 = arith.divf %75, %76 : vector<1x128xf32>
    %78 = vector.broadcast %77 : vector<1x128xf32> to vector<8x128xf32>
    %79 = arith.subf %73, %78 : vector<8x128xf32>
    %80 = arith.mulf %79, %79 : vector<8x128xf32>
    %cst_27 = arith.constant dense<0.000000e+00> : vector<128xf32>
    %81 = vector.multi_reduction <add>, %80, %cst_27 [0] : vector<8x128xf32> to vector<128xf32>
    %82 = vector.shape_cast %81 : vector<128xf32> to vector<1x128xf32>
    %cst_28 = arith.constant 8.000000e+00 : f32
    %83 = vector.broadcast %cst_28 : f32 to vector<1x128xf32>
    %84 = arith.divf %82, %83 : vector<1x128xf32>
    %cst_29 = arith.constant 9.99999974E-6 : f32
    %85 = vector.broadcast %cst_29 : f32 to vector<1x128xf32>
    %86 = arith.addf %84, %85 : vector<1x128xf32>
    %87 = math.rsqrt %86 : vector<1x128xf32>
    %88 = arith.mulf %87, %9 : vector<1x128xf32>
    %89 = arith.mulf %77, %88 : vector<1x128xf32>
    %90 = arith.subf %10, %89 : vector<1x128xf32>
    %91 = vector.broadcast %88 : vector<1x128xf32> to vector<8x128xf32>
    %92 = arith.mulf %73, %91 : vector<8x128xf32>
    %93 = vector.broadcast %90 : vector<1x128xf32> to vector<8x128xf32>
    %94 = arith.addf %92, %93 : vector<8x128xf32>
    %c2 = arith.constant 2 : index
    %c0_30 = arith.constant 0 : index
    %c0_31 = arith.constant 0 : index
    %95 = vector.load %arg2[%c2, %c0_30, %c0_31] : memref<3x128x128xf32, #tpu.memory_space<vmem>>, vector<1x128x128xf32>
    %96 = vector.shape_cast %95 : vector<1x128x128xf32> to vector<128x128xf32>
    %cst_32 = arith.constant dense<0.000000e+00> : vector<8x128xf32>
    %97 = tpu.matmul %94, %96, %cst_32 {dimension_numbers = #tpu.dot_dimension_numbers<[1], [0], [0], [1], [0, 0, 1, 1], [], []>} : vector<8x128xf32>, vector<128x128xf32>, vector<8x128xf32> -> vector<8x128xf32>
    %98 = vector.broadcast %11 : vector<1x128xf32> to vector<8x128xf32>
    %99 = arith.addf %97, %98 : vector<8x128xf32>
    %cst_33 = arith.constant 0.000000e+00 : f32
    %100 = vector.broadcast %cst_33 : f32 to vector<8x128xf32>
    %101 = arith.maximumf %99, %100 : vector<8x128xf32>
    %c0_34 = arith.constant 0 : index
    %c0_35 = arith.constant 0 : index
    %102 = vector.load %arg4[%c0_34, %c0_35] : memref<8x128xf32, #tpu.memory_space<vmem>>, vector<8x128xf32>
    tpu.vector_store %arg4[%c0_34, %c0_35], %101 {strides = array<i32>} : memref<8x128xf32, #tpu.memory_space<vmem>>, vector<8x128xf32>,
    return
  }
}

</mosaic_0001>

<llo_original>
// kernel: tpu_custom_call.1
$region0: #{tpu_custom_call.1}
  #allocation0 [shape = 'u32[]', space=smem, size = 0x4, offset = 0x4, fixed_abs, tag = 'smem constant byte address 0x4 - core index']
  #allocation1 [shape = 'u32[144,128]{1,0:T(1,128)}', space=vmem, size = 0x12000, scoped, tag = 'internal scratch']
  %s0 = inlined_call_operand.hbm [shape: f32[8,16], index: 0, kind: input, shape index: {}]
  %s1 = inlined_call_operand.hbm [shape: f32[16,128], index: 1, kind: input, shape index: {}]
  %s2 = inlined_call_operand.hbm [shape: f32[3,128,128], index: 2, kind: input, shape index: {}]
  %s3 = inlined_call_operand.hbm [shape: f32[10,128], index: 3, kind: input, shape index: {}]
  %s4 = inlined_call_operand.hbm [shape: f32[8,128], index: 4, kind: output, shape index: {}]
  %s5 = sld [smem:[#allocation0]]
  $region42: #{tpu_custom_call.1} parent=0
    _
  %s7 = ssub.s32 1, %s5
  %s8 = scalar_select 0, %s7, %s5
  $region1: #{tpu_custom_call.1} parent=0
    #allocation2 [shape = 'u8[4096]{0}', space=vmem, size = 0x1000, scoped, tag = 'input window, operand 0, single buffered']
    #allocation3 [shape = 's32[1]{0}', space=sflag, size = 0x4, scoped, tag = 'scoped memory for tpu_custom_call.1']
    #allocation4 [shape = 's32[1]{0}', space=sflag, size = 0x4, scoped, tag = 'scoped memory for tpu_custom_call.1']
    #allocation5 [shape = 'u8[8192]{0}', space=vmem, size = 0x2000, scoped, tag = 'input window, operand 1, single buffered']
    #allocation6 [shape = 's32[1]{0}', space=sflag, size = 0x4, scoped, tag = 'scoped memory for tpu_custom_call.1']
    #allocation7 [shape = 'u8[196608]{0}', space=vmem, size = 0x30000, scoped, tag = 'input window, operand 2, single buffered']
    #allocation8 [shape = 'u8[8192]{0}', space=vmem, size = 0x2000, scoped, tag = 'input window, operand 3, single buffered']
    #allocation9 [shape = 's32[1]{0}', space=sflag, size = 0x4, scoped, tag = 'scoped memory for tpu_custom_call.1']
    #allocation10 [shape = 'u8[4096]{0}', space=vmem, size = 0x1000, scoped, tag = 'output window, operand 0, single buffered']
    %9 = vsyncpa [#allocation3], 0
    %10 = vsyncpa [#allocation6], 0
    %11 = vsyncpa [#allocation9], 0
    %12 = vsyncpa [#allocation4], 0
    // Predicated region
    $region2: #{tpu_custom_call.1} parent=1 // pred_check
      _
    $region3: #{tpu_custom_call.1} parent=1 // pred_check_branch
      %14 = sbr.rel (0) target = $region5
    $region4: #{tpu_custom_call.1} parent=1 // pred_region
      %s16 = ssub.s32 128, 128
      %17 = vsyncadd [#allocation3], %s16
      %s19 = sshll.u32 [#allocation2], 4
      %s20 = int_to_ptr.vmem [resolvable:$true] %s19
      %22 = dma.hbm_to_vmem [thread:$0]  %s0, 128, %s20, [#allocation3]
    $region5: #{tpu_custom_call.1} parent=1 // pred_fallthru
      _
    // Predicated region
    $region6: #{tpu_custom_call.1} parent=1 // pred_check
      _
    $region7: #{tpu_custom_call.1} parent=1 // pred_check_branch
      %24 = sbr.rel (0) target = $region9
    $region8: #{tpu_custom_call.1} parent=1 // pred_region
      %s26 = ssub.s32 256, 256
      %27 = vsyncadd [#allocation6], %s26
      %s28 = sshll.u32 [#allocation5], 4
      %s29 = int_to_ptr.vmem [resolvable:$true] %s28
      %34 = dma.hbm_to_vmem [thread:$0]  %s1, 256, %s29, [#allocation6], 128, 128, 8
    $region9: #{tpu_custom_call.1} parent=1 // pred_fallthru
      _
    // Predicated region
    $region10: #{tpu_custom_call.1} parent=1 // pred_check
      _
    $region11: #{tpu_custom_call.1} parent=1 // pred_check_branch
      %36 = sbr.rel (0) target = $region13
    $region12: #{tpu_custom_call.1} parent=1 // pred_region
      %s38 = ssub.s32 6144, 6144
      %39 = vsyncadd [#allocation6], %s38
      %s40 = sshll.u32 [#allocation7], 4
      %s41 = int_to_ptr.vmem [resolvable:$true] %s40
      %46 = dma.hbm_to_vmem [thread:$0]  %s2, 6144, %s41, [#allocation6], 128, 128, 8
    $region13: #{tpu_custom_call.1} parent=1 // pred_fallthru
      _
    // Predicated region
    $region14: #{tpu_custom_call.1} parent=1 // pred_check
      _
    $region15: #{tpu_custom_call.1} parent=1 // pred_check_branch
      %48 = sbr.rel (0) target = $region17
    $region16: #{tpu_custom_call.1} parent=1 // pred_region
      %s50 = ssub.s32 256, 256
      %51 = vsyncadd [#allocation9], %s50
      %s52 = sshll.u32 [#allocation8], 4
      %s53 = int_to_ptr.vmem [resolvable:$true] %s52
      %58 = dma.hbm_to_vmem [thread:$0]  %s3, 256, %s53, [#allocation9], 128, 128, 8
    $region17: #{tpu_custom_call.1} parent=1 // pred_fallthru
      _
    // Predicated region
    $region18: #{tpu_custom_call.1} parent=1 // pred_check
      _
    $region19: #{tpu_custom_call.1} parent=1 // pred_check_branch
      %60 = sbr.rel (0) target = $region21
    $region20: #{tpu_custom_call.1} parent=1 // pred_region
      %61 = dma.done [#allocation3], 128
    $region21: #{tpu_custom_call.1} parent=1 // pred_fallthru
      _
    // Predicated region
    $region22: #{tpu_custom_call.1} parent=1 // pred_check
      _
    $region23: #{tpu_custom_call.1} parent=1 // pred_check_branch
      %63 = sbr.rel (0) target = $region25
    $region24: #{tpu_custom_call.1} parent=1 // pred_region
      %64 = dma.done [#allocation6], 256
    $region25: #{tpu_custom_call.1} parent=1 // pred_fallthru
      _
    // Predicated region
    $region26: #{tpu_custom_call.1} parent=1 // pred_check
      _
    $region27: #{tpu_custom_call.1} parent=1 // pred_check_branch
      %66 = sbr.rel (0) target = $region29
    $region28: #{tpu_custom_call.1} parent=1 // pred_region
      %67 = dma.done [#allocation6], 6144
    $region29: #{tpu_custom_call.1} parent=1 // pred_fallthru
      _
    // Predicated region
    $region30: #{tpu_custom_call.1} parent=1 // pred_check
      _
    $region31: #{tpu_custom_call.1} parent=1 // pred_check_branch
      %69 = sbr.rel (0) target = $region33
    $region32: #{tpu_custom_call.1} parent=1 // pred_region
      %70 = dma.done [#allocation9], 256
    $region33: #{tpu_custom_call.1} parent=1 // pred_fallthru
      _
    %v71 = vld [vmem:[#allocation2] sm:$0xff]
    %v72 = vld [vmem:[#allocation8] sm:$0xff]
    %v73 = vld [vmem:[#allocation8 + $0x8] sm:$0x3]
    %v74 = vld [vmem:[#allocation5] sm:$0xff]
    %v75 = vld [vmem:[#allocation5 + $0x8] sm:$0xff]
    %v76 = vlaneseq
    %v77 = vshrl.u32 %v76, 7
    %v78 = vsub.s32 0, %v77
    %v79 = vrot.slane %v72, %v78
    %vm80 = vcmask 130048
    %v82 = vsel %vm80, %v71, 0
    %84 = vmatprep.subr.mxu0 0.0
    %85 = vmatpush1.msra.mxu0 %v74
    %86 = vmatprep.subr.mxu0 0.0
    %87 = vmatpush1.msra.mxu0 %v75
    %88 = vmatprep.subr.mxu0 0.0
    %89 = vmatpush1.msra.mxu0 0.0
    %90 = vmatprep.subr.mxu0 0.0
    %91 = vmatpush1.msra.mxu0 0.0
    %92 = vmatprep.subr.mxu0 0.0
    %93 = vmatpush1.msra.mxu0 0.0
    %94 = vmatprep.subr.mxu0 0.0
    %95 = vmatpush1.msra.mxu0 0.0
    %96 = vmatprep.subr.mxu0 0.0
    %97 = vmatpush1.msra.mxu0 0.0
    %98 = vmatprep.subr.mxu0 0.0
    %99 = vmatpush1.msra.mxu0 0.0
    %100 = vmatprep.subr.mxu0 0.0
    %101 = vmatpush1.msra.mxu0 0.0
    %102 = vmatprep.subr.mxu0 0.0
    %103 = vmatpush1.msra.mxu0 0.0
    %104 = vmatprep.subr.mxu0 0.0
    %105 = vmatpush1.msra.mxu0 0.0
    %106 = vmatprep.subr.mxu0 0.0
    %107 = vmatpush1.msra.mxu0 0.0
    %108 = vmatprep.subr.mxu0 0.0
    %109 = vmatpush1.msra.mxu0 0.0
    %110 = vmatprep.subr.mxu0 0.0
    %111 = vmatpush1.msra.mxu0 0.0
    %112 = vmatprep.subr.mxu0 0.0
    %113 = vmatpush1.msra.mxu0 0.0
    %114 = vmatprep.subr.mxu0 0.0
    %115 = vmatpush1.msra.mxu0 0.0
    %116 = vmatprep.subr.mxu0 0.0
    %117 = vmatpush1.msra.mxu0 0.0
    %118 = vmatprep.subr.mxu0 0.0
    %119 = vmatpush1.msra.mxu0 0.0
    %120 = vmatprep.subr.mxu0 0.0
    %121 = vmatpush1.msra.mxu0 0.0
    %122 = vmatprep.subr.mxu0 0.0
    %123 = vmatpush1.msra.mxu0 0.0
    %124 = vmatprep.subr.mxu0 0.0
    %125 = vmatpush1.msra.mxu0 0.0
    %126 = vmatprep.subr.mxu0 0.0
    %127 = vmatpush1.msra.mxu0 0.0
    %128 = vmatprep.subr.mxu0 0.0
    %129 = vmatpush1.msra.mxu0 0.0
    %130 = vmatprep.subr.mxu0 0.0
    %131 = vmatpush1.msra.mxu0 0.0
    %132 = vmatprep.subr.mxu0 0.0
    %133 = vmatpush1.msra.mxu0 0.0
    %134 = vmatprep.subr.mxu0 0.0
    %135 = vmatpush1.msra.mxu0 0.0
    %136 = vmatprep.subr.mxu0 0.0
    %137 = vmatpush1.msra.mxu0 0.0
    %138 = vmatprep.subr.mxu0 0.0
    %139 = vmatpush1.msra.mxu0 0.0
    %140 = vmatprep.subr.mxu0 0.0
    %141 = vmatpush1.msra.mxu0 0.0
    %142 = vmatprep.subr.mxu0 0.0
    %143 = vmatpush1.msra.mxu0 0.0
    %144 = vmatprep.subr.mxu0 0.0
    %145 = vmatpush1.msra.mxu0 0.0
    %146 = vmatprep.subr.mxu0 0.0
    %147 = vmatpush1.msra.mxu0 0.0
    %148 = vmatprep.mubr.f32.mxu0 0.0
    %149 = vmatmul.mubr.f32.gmra.mrb[0].mxu0 %v82
    %v150 = vpop.f32.mrb[0].mxu0
    %v151 = vadd.f32 %v79, %v150
    %v152 = vpop.f32.mrb[0].mxu0
    %153 = vdwg.mxu0
    %v154 = vmax.f32 %v151, 0.0
    %v155 = vrot.slane %v154, 4
    %v156 = vadd.f32 %v154, %v155
    %v157 = vrot.slane %v156, 2
    %v158 = vadd.f32 %v156, %v157
    %v159 = vrot.slane %v158, 1
    %v160 = vadd.f32 %v158, %v159
    %v161 = vrcp.pop 8.0
    %v162 = vmul.f32 %v160, %v161
    %v163 = vsub.f32 %v154, %v162
    %v164 = vmul.f32 %v163, %v163
    %v165 = vrot.slane %v164, 4
    %v166 = vadd.f32 %v164, %v165
    %v167 = vrot.slane %v166, 2
    %v168 = vadd.f32 %v166, %v167
    %v169 = vrot.slane %v168, 1
    %v170 = vadd.f32 %v168, %v169
    %v171 = vmul.f32 %v170, %v161
    %v172 = vadd.f32 %v171, 1e-05
    %v173 = vrsqrt.pop %v172
    %v174 = vmul.f32 %v173, %v72
    %v175 = vmul.f32 %v162, %v174
    %v177 = vrot.slane %v175, 7
    %v179 = vsub.f32 %v72, %v177
    %v180 = vlaneseq
    %v181 = vshrl.u32 %v180, 7
    %v182 = vsub.s32 1, %v181
    %v183 = vrot.slane %v174, %v182
    %v184 = vmul.f32 %v154, %v183
    %v185 = vlaneseq
    %v186 = vshrl.u32 %v185, 7
    %v187 = vsub.s32 2, %v186
    %v188 = vrot.slane %v179, %v187
    %v189 = vadd.f32 %v184, %v188
    %v190 = vld [vmem:[#allocation7] sm:$0xff]
    %v191 = vld [vmem:[#allocation7 + $0x8] sm:$0xff]
    %v192 = vld [vmem:[#allocation7 + $0x10] sm:$0xff]
    %v193 = vld [vmem:[#allocation7 + $0x18] sm:$0xff]
    %v194 = vld [vmem:[#allocation7 + $0x20] sm:$0xff]
    %v195 = vld [vmem:[#allocation7 + $0x28] sm:$0xff]
    %v196 = vld [vmem:[#allocation7 + $0x30] sm:$0xff]
    %v197 = vld [vmem:[#allocation7 + $0x38] sm:$0xff]
    %v198 = vld [vmem:[#allocation7 + $0x40] sm:$0xff]
    %v199 = vld [vmem:[#allocation7 + $0x48] sm:$0xff]
    %v200 = vld [vmem:[#allocation7 + $0x50] sm:$0xff]
    %v201 = vld [vmem:[#allocation7 + $0x58] sm:$0xff]
    %v202 = vld [vmem:[#allocation7 + $0x60] sm:$0xff]
    %v203 = vld [vmem:[#allocation7 + $0x68] sm:$0xff]
    %v204 = vld [vmem:[#allocation7 + $0x70] sm:$0xff]
    %v205 = vld [vmem:[#allocation7 + $0x78] sm:$0xff]
    %v206 = vlaneseq
    %v207 = vshrl.u32 %v206, 7
    %v208 = vsub.s32 3, %v207
    %v209 = vrot.slane %v72, %v208
    %210 = vmatprep.subr.mxu0 0.0
    %211 = vmatpush1.msra.mxu0 %v190
    %212 = vmatprep.subr.mxu0 0.0
    %213 = vmatpush1.msra.mxu0 %v191
    %214 = vmatprep.subr.mxu0 0.0
    %215 = vmatpush1.msra.mxu0 %v192
    %216 = vmatprep.subr.mxu0 0.0
    %217 = vmatpush1.msra.mxu0 %v193
    %218 = vmatprep.subr.mxu0 0.0
    %219 = vmatpush1.msra.mxu0 %v194
    %220 = vmatprep.subr.mxu0 0.0
    %221 = vmatpush1.msra.mxu0 %v195
    %222 = vmatprep.subr.mxu0 0.0
    %223 = vmatpush1.msra.mxu0 %v196
    %224 = vmatprep.subr.mxu0 0.0
    %225 = vmatpush1.msra.mxu0 %v197
    %226 = vmatprep.subr.mxu0 0.0
    %227 = vmatpush1.msra.mxu0 %v198
    %228 = vmatprep.subr.mxu0 0.0
    %229 = vmatpush1.msra.mxu0 %v199
    %230 = vmatprep.subr.mxu0 0.0
    %231 = vmatpush1.msra.mxu0 %v200
    %232 = vmatprep.subr.mxu0 0.0
    %233 = vmatpush1.msra.mxu0 %v201
    %234 = vmatprep.subr.mxu0 0.0
    %235 = vmatpush1.msra.mxu0 %v202
    %236 = vmatprep.subr.mxu0 0.0
    %237 = vmatpush1.msra.mxu0 %v203
    %238 = vmatprep.subr.mxu0 0.0
    %239 = vmatpush1.msra.mxu0 %v204
    %240 = vmatprep.subr.mxu0 0.0
    %241 = vmatpush1.msra.mxu0 %v205
    %242 = vmatprep.subr.mxu0 0.0
    %243 = vmatpush1.msra.mxu0 0.0
    %244 = vmatprep.subr.mxu0 0.0
    %245 = vmatpush1.msra.mxu0 0.0
    %246 = vmatprep.subr.mxu0 0.0
    %247 = vmatpush1.msra.mxu0 0.0
    %248 = vmatprep.subr.mxu0 0.0
    %249 = vmatpush1.msra.mxu0 0.0
    %250 = vmatprep.subr.mxu0 0.0
    %251 = vmatpush1.msra.mxu0 0.0
    %252 = vmatprep.subr.mxu0 0.0
    %253 = vmatpush1.msra.mxu0 0.0
    %254 = vmatprep.subr.mxu0 0.0
    %255 = vmatpush1.msra.mxu0 0.0
    %256 = vmatprep.subr.mxu0 0.0
    %257 = vmatpush1.msra.mxu0 0.0
    %258 = vmatprep.subr.mxu0 0.0
    %259 = vmatpush1.msra.mxu0 0.0
    %260 = vmatprep.subr.mxu0 0.0
    %261 = vmatpush1.msra.mxu0 0.0
    %262 = vmatprep.subr.mxu0 0.0
    %263 = vmatpush1.msra.mxu0 0.0
    %264 = vmatprep.subr.mxu0 0.0
    %265 = vmatpush1.msra.mxu0 0.0
    %266 = vmatprep.subr.mxu0 0.0
    %267 = vmatpush1.msra.mxu0 0.0
    %268 = vmatprep.subr.mxu0 0.0
    %269 = vmatpush1.msra.mxu0 0.0
    %270 = vmatprep.subr.mxu0 0.0
    %271 = vmatpush1.msra.mxu0 0.0
    %272 = vmatprep.subr.mxu0 0.0
    %273 = vmatpush1.msra.mxu0 0.0
    %274 = vmatprep.mubr.f32.mxu0 0.0
    %275 = vmatmul.mubr.f32.gmra.mrb[0].mxu0 %v189
    %v276 = vpop.f32.mrb[0].mxu0
    %v277 = vadd.f32 %v209, %v276
    %v278 = vpop.f32.mrb[0].mxu0
    %279 = vdwg.mxu0
    %v280 = vmax.f32 %v277, 0.0
    %v281 = vrot.slane %v280, 4
    %v282 = vadd.f32 %v280, %v281
    %v283 = vrot.slane %v282, 2
    %v284 = vadd.f32 %v282, %v283
    %v285 = vrot.slane %v284, 1
    %v286 = vadd.f32 %v284, %v285
    %v287 = vmul.f32 %v286, %v161
    %v288 = vsub.f32 %v280, %v287
    %v289 = vmul.f32 %v288, %v288
    %v290 = vrot.slane %v289, 4
    %v291 = vadd.f32 %v289, %v290
    %v292 = vrot.slane %v291, 2
    %v293 = vadd.f32 %v291, %v292
    %v294 = vrot.slane %v293, 1
    %v295 = vadd.f32 %v293, %v294
    %v296 = vmul.f32 %v295, %v161
    %v297 = vadd.f32 %v296, 1e-05
    %v298 = vrsqrt.pop %v297
    %v299 = vmul.f32 %v298, %v72
    %v300 = vmul.f32 %v287, %v299
    %v302 = vrot.slane %v300, 7
    %v304 = vsub.f32 %v72, %v302
    %v305 = vlaneseq
    %v306 = vshrl.u32 %v305, 7
    %v307 = vsub.s32 4, %v306
    %v308 = vrot.slane %v299, %v307
    %v309 = vmul.f32 %v280, %v308
    %v310 = vlaneseq
    %v311 = vshrl.u32 %v310, 7
    %v312 = vsub.s32 5, %v311
    %v313 = vrot.slane %v304, %v312
    %v314 = vadd.f32 %v309, %v313
    %s315 = scalar_lea.vmem [#allocation7], 128
    %v316 = vld [vmem:[%s315] sm:$0xff]
    %v317 = vld [vmem:[%s315 + $0x8] sm:$0xff]
    %v318 = vld [vmem:[%s315 + $0x10] sm:$0xff]
    %v319 = vld [vmem:[%s315 + $0x18] sm:$0xff]
    %v320 = vld [vmem:[%s315 + $0x20] sm:$0xff]
    %v321 = vld [vmem:[%s315 + $0x28] sm:$0xff]
    %v322 = vld [vmem:[%s315 + $0x30] sm:$0xff]
    %v323 = vld [vmem:[%s315 + $0x38] sm:$0xff]
    %v324 = vld [vmem:[%s315 + $0x40] sm:$0xff]
    %v325 = vld [vmem:[%s315 + $0x48] sm:$0xff]
    %v326 = vld [vmem:[%s315 + $0x50] sm:$0xff]
    %v327 = vld [vmem:[%s315 + $0x58] sm:$0xff]
    %v328 = vld [vmem:[%s315 + $0x60] sm:$0xff]
    %v329 = vld [vmem:[%s315 + $0x68] sm:$0xff]
    %v330 = vld [vmem:[%s315 + $0x70] sm:$0xff]
    %v331 = vld [vmem:[%s315 + $0x78] sm:$0xff]
    %v332 = vlaneseq
    %v333 = vshrl.u32 %v332, 7
    %v334 = vsub.s32 6, %v333
    %v335 = vrot.slane %v72, %v334
    %336 = vmatprep.subr.mxu0 0.0
    %337 = vmatpush1.msra.mxu0 %v316
    %338 = vmatprep.subr.mxu0 0.0
    %339 = vmatpush1.msra.mxu0 %v317
    %340 = vmatprep.subr.mxu0 0.0
    %341 = vmatpush1.msra.mxu0 %v318
    %342 = vmatprep.subr.mxu0 0.0
    %343 = vmatpush1.msra.mxu0 %v319
    %344 = vmatprep.subr.mxu0 0.0
    %345 = vmatpush1.msra.mxu0 %v320
    %346 = vmatprep.subr.mxu0 0.0
    %347 = vmatpush1.msra.mxu0 %v321
    %348 = vmatprep.subr.mxu0 0.0
    %349 = vmatpush1.msra.mxu0 %v322
    %350 = vmatprep.subr.mxu0 0.0
    %351 = vmatpush1.msra.mxu0 %v323
    %352 = vmatprep.subr.mxu0 0.0
    %353 = vmatpush1.msra.mxu0 %v324
    %354 = vmatprep.subr.mxu0 0.0
    %355 = vmatpush1.msra.mxu0 %v325
    %356 = vmatprep.subr.mxu0 0.0
    %357 = vmatpush1.msra.mxu0 %v326
    %358 = vmatprep.subr.mxu0 0.0
    %359 = vmatpush1.msra.mxu0 %v327
    %360 = vmatprep.subr.mxu0 0.0
    %361 = vmatpush1.msra.mxu0 %v328
    %362 = vmatprep.subr.mxu0 0.0
    %363 = vmatpush1.msra.mxu0 %v329
    %364 = vmatprep.subr.mxu0 0.0
    %365 = vmatpush1.msra.mxu0 %v330
    %366 = vmatprep.subr.mxu0 0.0
    %367 = vmatpush1.msra.mxu0 %v331
    %368 = vmatprep.subr.mxu0 0.0
    %369 = vmatpush1.msra.mxu0 0.0
    %370 = vmatprep.subr.mxu0 0.0
    %371 = vmatpush1.msra.mxu0 0.0
    %372 = vmatprep.subr.mxu0 0.0
    %373 = vmatpush1.msra.mxu0 0.0
    %374 = vmatprep.subr.mxu0 0.0
    %375 = vmatpush1.msra.mxu0 0.0
    %376 = vmatprep.subr.mxu0 0.0
    %377 = vmatpush1.msra.mxu0 0.0
    %378 = vmatprep.subr.mxu0 0.0
    %379 = vmatpush1.msra.mxu0 0.0
    %380 = vmatprep.subr.mxu0 0.0
    %381 = vmatpush1.msra.mxu0 0.0
    %382 = vmatprep.subr.mxu0 0.0
    %383 = vmatpush1.msra.mxu0 0.0
    %384 = vmatprep.subr.mxu0 0.0
    %385 = vmatpush1.msra.mxu0 0.0
    %386 = vmatprep.subr.mxu0 0.0
    %387 = vmatpush1.msra.mxu0 0.0
    %388 = vmatprep.subr.mxu0 0.0
    %389 = vmatpush1.msra.mxu0 0.0
    %390 = vmatprep.subr.mxu0 0.0
    %391 = vmatpush1.msra.mxu0 0.0
    %392 = vmatprep.subr.mxu0 0.0
    %393 = vmatpush1.msra.mxu0 0.0
    %394 = vmatprep.subr.mxu0 0.0
    %395 = vmatpush1.msra.mxu0 0.0
    %396 = vmatprep.subr.mxu0 0.0
    %397 = vmatpush1.msra.mxu0 0.0
    %398 = vmatprep.subr.mxu0 0.0
    %399 = vmatpush1.msra.mxu0 0.0
    %400 = vmatprep.mubr.f32.mxu0 0.0
    %401 = vmatmul.mubr.f32.gmra.mrb[0].mxu0 %v314
    %v402 = vpop.f32.mrb[0].mxu0
    %v403 = vadd.f32 %v335, %v402
    %v404 = vpop.f32.mrb[0].mxu0
    %405 = vdwg.mxu0
    %v406 = vmax.f32 %v403, 0.0
    %v407 = vrot.slane %v406, 4
    %v408 = vadd.f32 %v406, %v407
    %v409 = vrot.slane %v408, 2
    %v410 = vadd.f32 %v408, %v409
    %v411 = vrot.slane %v410, 1
    %v412 = vadd.f32 %v410, %v411
    %v413 = vmul.f32 %v412, %v161
    %v414 = vsub.f32 %v406, %v413
    %v415 = vmul.f32 %v414, %v414
    %v416 = vrot.slane %v415, 4
    %v417 = vadd.f32 %v415, %v416
    %v418 = vrot.slane %v417, 2
    %v419 = vadd.f32 %v417, %v418
    %v420 = vrot.slane %v419, 1
    %v421 = vadd.f32 %v419, %v420
    %v422 = vmul.f32 %v421, %v161
    %v423 = vadd.f32 %v422, 1e-05
    %v424 = vrsqrt.pop %v423
    %v425 = vmul.f32 %v424, %v72
    %v426 = vmul.f32 %v413, %v425
    %v428 = vrot.slane %v426, 7
    %v430 = vsub.f32 %v73, %v428
    %v431 = vlaneseq
    %v432 = vshrl.u32 %v431, 7
    %v433 = vsub.s32 7, %v432
    %v434 = vrot.slane %v425, %v433
    %v435 = vmul.f32 %v406, %v434
    %v436 = vlaneseq
    %v437 = vshrl.u32 %v436, 7
    %v438 = vsub.s32 0, %v437
    %v439 = vrot.slane %v430, %v438
    %v440 = vadd.f32 %v435, %v439
    %s441 = scalar_lea.vmem [#allocation7], 256
    %v442 = vld [vmem:[%s441] sm:$0xff]
    %v443 = vld [vmem:[%s441 + $0x8] sm:$0xff]
    %v444 = vld [vmem:[%s441 + $0x10] sm:$0xff]
    %v445 = vld [vmem:[%s441 + $0x18] sm:$0xff]
    %v446 = vld [vmem:[%s441 + $0x20] sm:$0xff]
    %v447 = vld [vmem:[%s441 + $0x28] sm:$0xff]
    %v448 = vld [vmem:[%s441 + $0x30] sm:$0xff]
    %v449 = vld [vmem:[%s441 + $0x38] sm:$0xff]
    %v450 = vld [vmem:[%s441 + $0x40] sm:$0xff]
    %v451 = vld [vmem:[%s441 + $0x48] sm:$0xff]
    %v452 = vld [vmem:[%s441 + $0x50] sm:$0xff]
    %v453 = vld [vmem:[%s441 + $0x58] sm:$0xff]
    %v454 = vld [vmem:[%s441 + $0x60] sm:$0xff]
    %v455 = vld [vmem:[%s441 + $0x68] sm:$0xff]
    %v456 = vld [vmem:[%s441 + $0x70] sm:$0xff]
    %v457 = vld [vmem:[%s441 + $0x78] sm:$0xff]
    %v458 = vlaneseq
    %v459 = vshrl.u32 %v458, 7
    %v460 = vsub.s32 1, %v459
    %v461 = vrot.slane %v73, %v460
    %462 = vmatprep.subr.mxu0 0.0
    %463 = vmatpush1.msra.mxu0 %v442
    %464 = vmatprep.subr.mxu0 0.0
    %465 = vmatpush1.msra.mxu0 %v443
    %466 = vmatprep.subr.mxu0 0.0
    %467 = vmatpush1.msra.mxu0 %v444
    %468 = vmatprep.subr.mxu0 0.0
    %469 = vmatpush1.msra.mxu0 %v445
    %470 = vmatprep.subr.mxu0 0.0
    %471 = vmatpush1.msra.mxu0 %v446
    %472 = vmatprep.subr.mxu0 0.0
    %473 = vmatpush1.msra.mxu0 %v447
    %474 = vmatprep.subr.mxu0 0.0
    %475 = vmatpush1.msra.mxu0 %v448
    %476 = vmatprep.subr.mxu0 0.0
    %477 = vmatpush1.msra.mxu0 %v449
    %478 = vmatprep.subr.mxu0 0.0
    %479 = vmatpush1.msra.mxu0 %v450
    %480 = vmatprep.subr.mxu0 0.0
    %481 = vmatpush1.msra.mxu0 %v451
    %482 = vmatprep.subr.mxu0 0.0
    %483 = vmatpush1.msra.mxu0 %v452
    %484 = vmatprep.subr.mxu0 0.0
    %485 = vmatpush1.msra.mxu0 %v453
    %486 = vmatprep.subr.mxu0 0.0
    %487 = vmatpush1.msra.mxu0 %v454
    %488 = vmatprep.subr.mxu0 0.0
    %489 = vmatpush1.msra.mxu0 %v455
    %490 = vmatprep.subr.mxu0 0.0
    %491 = vmatpush1.msra.mxu0 %v456
    %492 = vmatprep.subr.mxu0 0.0
    %493 = vmatpush1.msra.mxu0 %v457
    %494 = vmatprep.subr.mxu0 0.0
    %495 = vmatpush1.msra.mxu0 0.0
    %496 = vmatprep.subr.mxu0 0.0
    %497 = vmatpush1.msra.mxu0 0.0
    %498 = vmatprep.subr.mxu0 0.0
    %499 = vmatpush1.msra.mxu0 0.0
    %500 = vmatprep.subr.mxu0 0.0
    %501 = vmatpush1.msra.mxu0 0.0
    %502 = vmatprep.subr.mxu0 0.0
    %503 = vmatpush1.msra.mxu0 0.0
    %504 = vmatprep.subr.mxu0 0.0
    %505 = vmatpush1.msra.mxu0 0.0
    %506 = vmatprep.subr.mxu0 0.0
    %507 = vmatpush1.msra.mxu0 0.0
    %508 = vmatprep.subr.mxu0 0.0
    %509 = vmatpush1.msra.mxu0 0.0
    %510 = vmatprep.subr.mxu0 0.0
    %511 = vmatpush1.msra.mxu0 0.0
    %512 = vmatprep.subr.mxu0 0.0
    %513 = vmatpush1.msra.mxu0 0.0
    %514 = vmatprep.subr.mxu0 0.0
    %515 = vmatpush1.msra.mxu0 0.0
    %516 = vmatprep.subr.mxu0 0.0
    %517 = vmatpush1.msra.mxu0 0.0
    %518 = vmatprep.subr.mxu0 0.0
    %519 = vmatpush1.msra.mxu0 0.0
    %520 = vmatprep.subr.mxu0 0.0
    %521 = vmatpush1.msra.mxu0 0.0
    %522 = vmatprep.subr.mxu0 0.0
    %523 = vmatpush1.msra.mxu0 0.0
    %524 = vmatprep.subr.mxu0 0.0
    %525 = vmatpush1.msra.mxu0 0.0
    %526 = vmatprep.mubr.f32.mxu0 0.0
    %527 = vmatmul.mubr.f32.gmra.mrb[0].mxu0 %v440
    %v528 = vpop.f32.mrb[0].mxu0
    %v529 = vadd.f32 %v461, %v528
    %v530 = vpop.f32.mrb[0].mxu0
    %531 = vdwg.mxu0
    %v532 = vmax.f32 %v529, 0.0
    %533 = vst [vmem:[#allocation10] sm:$0xff] %v532
    // Predicated region
    $region34: #{tpu_custom_call.1} parent=1 // pred_check
      _
    $region35: #{tpu_custom_call.1} parent=1 // pred_check_branch
      %535 = sbr.rel (0) target = $region37
    $region36: #{tpu_custom_call.1} parent=1 // pred_region
      %s537 = ssub.s32 128, 128
      %538 = vsyncadd [#allocation4], %s537
      %s540 = sshll.u32 [#allocation10], 4
      %s541 = int_to_ptr.vmem [resolvable:$true] %s540
      %543 = dma.vmem_to_hbm [thread:$0]  %s541, 128, %s4, [#allocation4]
    $region37: #{tpu_custom_call.1} parent=1 // pred_fallthru
      _
    // Predicated region
    $region38: #{tpu_custom_call.1} parent=1 // pred_check
      _
    $region39: #{tpu_custom_call.1} parent=1 // pred_check_branch
      %545 = sbr.rel (0) target = $region41
    $region40: #{tpu_custom_call.1} parent=1 // pred_region
      %546 = dma.done [#allocation4], 128
    $region41: #{tpu_custom_call.1} parent=1 // pred_fallthru
      _
    %547 = vsyncpa [#allocation3], 1
    %548 = vsyncpa [#allocation6], 1
    %549 = vsyncpa [#allocation9], 1
    %550 = vsyncpa [#allocation4], 1

</llo_original>
